<compile_context>
chip_gen: v7x
topology: tpu7x:2x2x1
jax: 0.10.0
libtpu: 0.0.40
codegen_flags: <defaults>
</compile_context>

<pallas_src>
import jax
import jax.numpy as jnp
from jax.experimental import pallas as pl
from jax.experimental.pallas import tpu as pltpu


def _double_bitwise_not_kernel(a_ref, o_ref):
    # b = ~a ; out = ~b.  The two VPU NOTs are fully hidden under the HBM DMAs
    # (and Mosaic may fold the pair); keeping both preserves the module shape.
    o_ref[...] = ~(~a_ref[...])


_MIN_SPLIT_BYTES = 2 << 20  # below this, one block / one grid step is fine


def _block_cap_bytes():
    """Per-generation cap on one (tm, W) block (input block == output block)."""
    try:
        kind = jax.devices()[0].device_kind.lower()
    except Exception:
        kind = ""
    if "v5e" in kind or "v5 lite" in kind or "v5lite" in kind:
        return 3 << 20   # 4 double-buffered blocks = 12 MiB < 16 MiB scoped default
    if "v6" in kind:
        return 8 << 20   # 32 MiB of buffers; vmem_limit_bytes raised explicitly
    if "v7" in kind:
        return 6 << 20   # 24 MiB of buffers, well under 64 MiB physical VMEM
    return 4 << 20       # conservative default (v4 / v5p / unknown)


def _run_slab(slab, *, sublane):
    """Run the kernel over a lane-dense (rows, W) slab; returns ~~slab."""
    rows, W = int(slab.shape[0]), int(slab.shape[1])
    itemsize = jnp.dtype(slab.dtype).itemsize
    bytes_per_row = W * itemsize
    slab_bytes = rows * bytes_per_row
    cap = _block_cap_bytes()

    if slab_bytes <= min(cap, _MIN_SPLIT_BYTES):
        # Small tensor: one block equal to the full array dims (always legal).
        tm = rows
    else:
        # Largest sublane-aligned tm under the per-generation cap ...
        max_tm = max(sublane, (cap // bytes_per_row) // sublane * sublane)
        # ... but force >= ~4 grid steps so v7x's two TensorCores both get row
        # tiles and input/output DMAs pipeline across steps (neutral on
        # v5e/v6e).  Blocks stay > ~0.5 MiB because slab_bytes > 2 MiB here.
        quarter = -(-rows // 4)                                  # ceil(rows/4)
        quarter = max(sublane, -(-quarter // sublane) * sublane)  # round up
        tm = min(max_tm, quarter)

    # Partial last block (when tm does not divide rows) is masked by Pallas --
    # no padding copy needed.
    grid = (pl.cdiv(rows, tm),)

    # 2 input + 2 output buffers of one block each, plus headroom.  Safe on
    # every generation (v7x physical VMEM = 64 MiB; v5e/v6e = 128 MiB).
    vmem_limit = int(max(32 << 20, 4 * tm * bytes_per_row + (2 << 20)))

    return pl.pallas_call(
        _double_bitwise_not_kernel,
        out_shape=jax.ShapeDtypeStruct((rows, W), slab.dtype),
        grid_spec=pltpu.PrefetchScalarGridSpec(
            num_scalar_prefetch=0,
            grid=grid,
            in_specs=[pl.BlockSpec((tm, W), lambda i: (i, 0))],
            out_specs=pl.BlockSpec((tm, W), lambda i: (i, 0)),
        ),
        compiler_params=pltpu.CompilerParams(
            # Parallel axis => row tiles shard across v7x's 2 TensorCores.
            dimension_semantics=("parallel",),
            vmem_limit_bytes=vmem_limit,
        ),
        # NOTE: input_output_aliases={0: 0} would elide the output allocation,
        # but unless the caller donates its input at the jit boundary XLA has
        # to insert a defensive copy of the operand (doubling HBM traffic for
        # this memory-bound op), so aliasing is deliberately left off here.
    )(slab)


def double_bitwise_not(a):
    """torch.bitwise_not(torch.bitwise_not(a)) via a Pallas TPU kernel."""
    orig_shape = a.shape
    orig_dtype = a.dtype

    flat = a.reshape(-1)
    n = int(flat.shape[0])
    if n == 0:
        return a

    itemsize = jnp.dtype(orig_dtype).itemsize
    if itemsize < 4 and jnp.issubdtype(orig_dtype, jnp.integer):
        pack = 4 // itemsize            # 4 for int8/uint8, 2 for int16/uint16
    else:
        pack = 1                        # 32/64-bit ints, bool

    # Elements that reach the kernel: the largest prefix that is pack-aligned
    # and, after packing, a whole number of 128-lane rows.
    n_bulk = (n // (pack * 128)) * (pack * 128)

    if n_bulk == 0:
        # Tiny tensor (< one packed lane row): a kernel launch + DMA round
        # trip costs more than the op itself; do it with plain jnp.
        return (~(~flat)).reshape(orig_shape)

    bulk = flat if n_bulk == n else flat[:n_bulk]

    if pack > 1:
        # Pack sub-32-bit ints into uint32: bitwise_not is invariant under the
        # reinterpretation, and the kernel stays on clean 32-bit (8,128) tiles.
        work = jax.lax.bitcast_convert_type(
            bulk.reshape(n_bulk // pack, pack), jnp.uint32)
    else:
        work = bulk
    n_work = int(work.shape[0])          # multiple of 128 by construction
    work_itemsize = jnp.dtype(work.dtype).itemsize
    # Native sublane tile of the working dtype: 8 for 32-bit, 16 for 16-bit,
    # 32 for 8-bit/bool (only bool ever hits the non-32-bit case here).
    sublane = 8 * (4 // work_itemsize)

    # Widest lane-dense W (multiple of 128) that divides the bulk exactly.
    W = 128
    for cand in (4096, 2048, 1024, 512, 256):
        if n_work % cand == 0:
            W = cand
            break
    slab = work.reshape(n_work // W, W)

    out_work = _run_slab(slab, sublane=sublane).reshape(-1)

    if pack > 1:
        out_bulk = jax.lax.bitcast_convert_type(out_work, orig_dtype).reshape(-1)
    else:
        out_bulk = out_work

    if n_bulk == n:
        out_flat = out_bulk
    else:
        # Ragged tail (< pack*128 elements): plain jnp, then stitch.  This
        # touches the bulk once at the concat -- still far cheaper than the
        # old pad-the-input + slice-the-output scheme (2 extra full copies).
        out_flat = jnp.concatenate([out_bulk, ~(~flat[n_bulk:])])

    return out_flat.reshape(orig_shape)


if __name__ == "__main__":
    key = jax.random.PRNGKey(0)
    k1, k2 = jax.random.split(key)

    # Primary case matching the torch_glow test style: (2, 4, 16, 16) int32.
    x = jax.random.randint(k1, (2, 4, 16, 16), minval=-100, maxval=100,
                           dtype=jnp.int32)
    y = jax.block_until_ready(double_bitwise_not(x))
    ref = ~(~x)
    assert y.dtype == x.dtype and y.shape == x.shape
    assert bool(jnp.all(y == ref))

    # Packed sub-32-bit path: int8 exercises the uint32 packing.
    x8 = jax.random.randint(k2, (2, 4, 16, 16), minval=-128, maxval=128,
                            dtype=jnp.int32).astype(jnp.int8)
    y8 = jax.block_until_ready(double_bitwise_not(x8))
    ref8 = ~(~x8)
    assert y8.dtype == x8.dtype and y8.shape == x8.shape
    assert bool(jnp.all(y8 == ref8))

    print("KERNEL_OK")
</pallas_src>

<mosaic_0001>
module attributes {stable_mosaic.version = 11 : i64} {
  func.func @_double_bitwise_not_kernel(%arg0: i32, %arg1: memref<1x2048xi32, #tpu.memory_space<vmem>>, %arg2: memref<1x2048xi32, #tpu.memory_space<vmem>>) attributes {dimension_semantics = [#tpu.dimension_semantics<parallel>], iteration_bounds = array<i64: 1>, scalar_prefetch = 0 : i64, scratch_operands = 0 : i64, tpu.core_type = #tpu.core_type<tc>, window_params = [{transform_indices = @transform_0, window_bounds = array<i64: 1, 2048>}, {transform_indices = @transform_1, window_bounds = array<i64: 1, 2048>}]} {
    %c0 = arith.constant 0 : index
    %c0_0 = arith.constant 0 : index
    %0 = vector.load %arg1[%c0, %c0_0] : memref<1x2048xi32, #tpu.memory_space<vmem>>, vector<1x2048xi32>
    %cst = arith.constant dense<-1> : vector<1x2048xi32>
    %1 = arith.xori %0, %cst : vector<1x2048xi32>
    %cst_1 = arith.constant dense<-1> : vector<1x2048xi32>
    %2 = arith.xori %1, %cst_1 : vector<1x2048xi32>
    %c0_2 = arith.constant 0 : index
    %c0_3 = arith.constant 0 : index
    %3 = vector.load %arg2[%c0_2, %c0_3] : memref<1x2048xi32, #tpu.memory_space<vmem>>, vector<1x2048xi32>
    tpu.vector_store %arg2[%c0_2, %c0_3], %2 {strides = array<i32>} : memref<1x2048xi32, #tpu.memory_space<vmem>>, vector<1x2048xi32>,
    return
  }
  func.func @transform_0(%arg0: i32) -> (i32, i32) {
    %c0_i32 = arith.constant 0 : i32
    %c0_i32_0 = arith.constant 0 : i32
    return %arg0, %c0_i32 : i32, i32
  }
  func.func @transform_1(%arg0: i32) -> (i32, i32) {
    %c0_i32 = arith.constant 0 : i32
    %c0_i32_0 = arith.constant 0 : i32
    return %arg0, %c0_i32 : i32, i32
  }
}

</mosaic_0001>

<llo_original>
// kernel: tpu_custom_call.1
$region0: #{tpu_custom_call.1}
  #allocation0 [shape = 'u32[]', space=smem, size = 0x4, offset = 0x4, fixed_abs, tag = 'smem constant byte address 0x4 - core index']
  #allocation1 [shape = 'u32[144,128]{1,0:T(1,128)}', space=vmem, size = 0x12000, scoped, tag = 'internal scratch']
  %s0 = inlined_call_operand.hbm [shape: s32[1,2048], index: 0, kind: input, shape index: {}]
  %s1 = inlined_call_operand.hbm [shape: s32[1,2048], index: 1, kind: output, shape index: {}]
  %s2 = sld [smem:[#allocation0]]
  $region18: #{tpu_custom_call.1} parent=0
    _
  %s4 = ssub.s32 1, %s2
  %s5 = scalar_select 0, %s4, %s2
  $region1: #{tpu_custom_call.1} parent=0
    #allocation2 [shape = 'u8[8192]{0}', space=vmem, size = 0x2000, scoped, tag = 'input window, operand 0, single buffered']
    #allocation3 [shape = 's32[1]{0}', space=sflag, size = 0x4, scoped, tag = 'scoped memory for tpu_custom_call.1']
    #allocation4 [shape = 's32[1]{0}', space=sflag, size = 0x4, scoped, tag = 'scoped memory for tpu_custom_call.1']
    #allocation5 [shape = 'u8[8192]{0}', space=vmem, size = 0x2000, scoped, tag = 'output window, operand 0, single buffered']
    %6 = vsyncpa [#allocation3], 0
    %7 = vsyncpa [#allocation4], 0
    // Predicated region
    $region2: #{tpu_custom_call.1} parent=1 // pred_check
      _
    $region3: #{tpu_custom_call.1} parent=1 // pred_check_branch
      %9 = sbr.rel (0) target = $region5
    $region4: #{tpu_custom_call.1} parent=1 // pred_region
      %s11 = ssub.s32 256, 256
      %12 = vsyncadd [#allocation3], %s11
      %s14 = sshll.u32 [#allocation2], 4
      %s15 = int_to_ptr.vmem [resolvable:$true] %s14
      %17 = dma.hbm_to_vmem [thread:$0]  %s0, 256, %s15, [#allocation3]
    $region5: #{tpu_custom_call.1} parent=1 // pred_fallthru
      _
    // Predicated region
    $region6: #{tpu_custom_call.1} parent=1 // pred_check
      _
    $region7: #{tpu_custom_call.1} parent=1 // pred_check_branch
      %19 = sbr.rel (0) target = $region9
    $region8: #{tpu_custom_call.1} parent=1 // pred_region
      %20 = dma.done [#allocation3], 256
    $region9: #{tpu_custom_call.1} parent=1 // pred_fallthru
      _
    %v21 = vld [vmem:[#allocation2] sm:$0xff]
    %v22 = vld [vmem:[#allocation2 + $0x8] sm:$0xff]
    %23 = vst [vmem:[#allocation5] sm:$0xff] %v21
    %24 = vst [vmem:[#allocation5 + $0x8] sm:$0xff] %v22
    // Predicated region
    $region10: #{tpu_custom_call.1} parent=1 // pred_check
      _
    $region11: #{tpu_custom_call.1} parent=1 // pred_check_branch
      %26 = sbr.rel (0) target = $region13
    $region12: #{tpu_custom_call.1} parent=1 // pred_region
      %s28 = ssub.s32 256, 256
      %29 = vsyncadd [#allocation4], %s28
      %s31 = sshll.u32 [#allocation5], 4
      %s32 = int_to_ptr.vmem [resolvable:$true] %s31
      %34 = dma.vmem_to_hbm [thread:$0]  %s32, 256, %s1, [#allocation4]
    $region13: #{tpu_custom_call.1} parent=1 // pred_fallthru
      _
    // Predicated region
    $region14: #{tpu_custom_call.1} parent=1 // pred_check
      _
    $region15: #{tpu_custom_call.1} parent=1 // pred_check_branch
      %36 = sbr.rel (0) target = $region17
    $region16: #{tpu_custom_call.1} parent=1 // pred_region
      %37 = dma.done [#allocation4], 256
    $region17: #{tpu_custom_call.1} parent=1 // pred_fallthru
      _
    %38 = vsyncpa [#allocation3], 1
    %39 = vsyncpa [#allocation4], 1

</llo_original>
